<compile_context>
chip_gen: v7x
topology: tpu7x:2x2x1
jax: 0.10.0
libtpu: 0.0.40
codegen_flags: <defaults>
</compile_context>

<pallas_src>
import functools

import jax
import jax.numpy as jnp
from jax import lax
from jax.experimental import pallas as pl
from jax.experimental.pallas import tpu as pltpu

EMBED = 64  # nn.MultiheadAttention(embed_dim=64, num_heads=1) => dim_in must be 64


# ----------------------------------------------------------------------------- #
# Kernel
# ----------------------------------------------------------------------------- #
def _gnn_kernel(x_ref, mask_ref, wqkv_ref, wo_ref, b_ref, out_ref, *, compute_dtype):
    """Single-head attention for a tile of BT batch elements.

    x_ref:    (BT, N, D)   input nodes (f32)
    mask_ref: (BT, 1, N)   int32 key-padding mask (nonzero = valid key)
    wqkv_ref: (D, 3*D)     [scale*Wq^T | Wk^T | Wv^T]   (compute_dtype)
    wo_ref:   (D, D)       Wo^T                         (compute_dtype)
    b_ref:    (4, D)       rows: [scale*bq, bk, bv, bo] (f32)
    out_ref:  (BT, N, D)   f32 output
    """
    bt, n, d = x_ref.shape
    rows = bt * n
    use_approx = jnp.dtype(compute_dtype) == jnp.dtype(jnp.bfloat16)

    x3 = x_ref[...]                              # (BT, N, D)
    x2 = x3.reshape(rows, d)                     # (BT*N, D)
    b_all = b_ref[...]                           # (4, D) f32

    # L2 normalization for the query/key path (value uses raw x = xn * norm).
    norm = jnp.sqrt(jnp.sum(x2 * x2, axis=-1, keepdims=True)) + 1e-6   # (rows, 1)
    xn = x2 * pl.reciprocal(norm, approx=False)                        # (rows, D)

    # Fused in-projection: one (rows, 64) @ (64, 192) MXU matmul, f32 accumulation.
    qkv = jnp.dot(xn.astype(compute_dtype), wqkv_ref[...],
                  preferred_element_type=jnp.float32)                  # (rows, 3D) f32
    q = qkv[:, 0:d] + b_all[0:1, :]              # softmax scale already folded in
    k = qkv[:, d:2 * d] + b_all[1:2, :]
    v = norm * qkv[:, 2 * d:3 * d] + b_all[2:3, :]   # x @ Wv^T == norm * (xn @ Wv^T)

    q3 = q.reshape(bt, n, d).astype(compute_dtype)
    k3 = k.reshape(bt, n, d).astype(compute_dtype)
    v3 = v.reshape(bt, n, d).astype(compute_dtype)

    # Batched attention scores: contract last dims directly (no explicit k.T).
    scores = lax.dot_general(
        q3, k3, dimension_numbers=(((2,), (2,)), ((0,), (0,))),
        preferred_element_type=jnp.float32)      # (BT, N, N) f32

    # Key-padding bias built in-kernel: 0 for valid keys, -1e30 for padded
    # (finite => no NaN hazard; fully-masked rows yield a uniform softmax,
    #  unlike torch which yields NaN — only matters if such rows occur).
    mask = mask_ref[...]                         # (BT, 1, N) int32
    scores = scores + jnp.where(mask != 0, jnp.float32(0.0), jnp.float32(-1e30))

    m = jnp.max(scores, axis=-1, keepdims=True)
    p = jnp.exp(scores - m)
    denom = jnp.sum(p, axis=-1, keepdims=True)
    p = p * pl.reciprocal(denom, approx=use_approx)

    attn = lax.dot_general(
        p.astype(compute_dtype), v3,
        dimension_numbers=(((2,), (1,)), ((0,), (0,))),
        preferred_element_type=jnp.float32)      # (BT, N, D) f32

    # Output projection: one (rows, 64) @ (64, 64) matmul, then one bulk store.
    out = jnp.dot(attn.reshape(rows, d).astype(compute_dtype), wo_ref[...],
                  preferred_element_type=jnp.float32) + b_all[3:4, :]
    out_ref[...] = out.reshape(bt, n, d).astype(out_ref.dtype)


# ----------------------------------------------------------------------------- #
# Generation-aware tiling helpers (trace-time Python)
# ----------------------------------------------------------------------------- #
def _vmem_limit_bytes():
    """Scoped-VMEM limit: half of physical VMEM, capped at 64 MiB.

    v5e/v6e (128 MiB physical) -> 64 MiB; v7x (64 MiB) / unknown -> 32 MiB."""
    phys = 64 * 1024 * 1024
    try:
        phys = int(pltpu.get_tpu_info().vmem_capacity_bytes)
    except Exception:
        pass
    return max(32 * 1024 * 1024, min(phys // 2, 64 * 1024 * 1024))


def _tensorcores_per_chip():
    """2 TensorCores per chip on v4/v5p/v7x; 1 on v5e/v6e (and on failure)."""
    try:
        kind = jax.devices()[0].device_kind.lower()
    except Exception:
        return 1
    return 2 if any(t in kind for t in ("v7", "v4", "v5p")) else 1


def _choose_tiling(B, N, budget_bytes, two_core, target_rows=4096):
    """Pick (BT, B_pad).  Prefers a divisor of B (no HBM pad/slice copies)."""
    D = EMBED
    # Conservative per-batch-element VMEM estimate: blocks + intermediates (~16x the
    # (N, D) f32 tile) + scores/probability (~3x the (N, N) f32 tile).
    per_bt = N * D * 4 * 16 + N * N * 4 * 3
    bt_max = max(1, min(target_rows // max(N, 1), budget_bytes // per_bt))
    bt_max = min(bt_max, B)
    if two_core and B >= 2:
        # Keep >= 2 grid steps so both TensorCores get work (2-TC chips only).
        bt_max = min(bt_max, max(1, B // 2))

    best_div = 1
    for bt in range(bt_max, 0, -1):
        if B % bt == 0:
            best_div = bt
            break
    if 2 * best_div >= bt_max:
        return best_div, B                       # divisor close enough: no padding
    # Pathological B (e.g. large prime): pad rather than run tiny steps.
    return bt_max, pl.cdiv(B, bt_max) * bt_max


def _prep_params(params, compute_dtype):
    """One-time glue: fuse weights, fold the 1/sqrt(D) softmax scale, cast weights."""
    D = EMBED
    scale = D ** -0.5
    wqkv = jnp.concatenate(
        [scale * params["wq"].T, params["wk"].T, params["wv"].T], axis=1)  # (D, 3D)
    wo = params["wo"].T                                                    # (D, D)
    biases = jnp.stack(
        [scale * params["bq"], params["bk"], params["bv"], params["bo"]], axis=0)  # (4, D)
    return wqkv.astype(compute_dtype), wo.astype(compute_dtype), biases.astype(jnp.float32)


# ----------------------------------------------------------------------------- #
# Public wrapper
# ----------------------------------------------------------------------------- #
@functools.partial(jax.jit, static_argnames=("compute_dtype",))
def gnn_forward(x, mask_bool, params, compute_dtype=jnp.bfloat16):
    """x: (B, N, 64) f32, mask_bool: (B, N) bool (True = valid node).

    compute_dtype: MXU operand dtype (bf16 default; f32 for bit-faithful checks).
    Accumulation, normalization and softmax statistics are always f32.
    """
    B, N, D = x.shape
    assert D == EMBED
    x = x.astype(jnp.float32)
    mask_i32 = mask_bool.astype(jnp.int32).reshape(B, 1, N)

    wqkv, wo, biases = _prep_params(params, compute_dtype)

    vmem_limit = _vmem_limit_bytes()
    two_core = _tensorcores_per_chip() >= 2
    BT, B_pad = _choose_tiling(B, N, budget_bytes=vmem_limit // 2, two_core=two_core)

    if B_pad != B:   # only for pathological B (no usable divisor near the target)
        x = jnp.pad(x, ((0, B_pad - B), (0, 0), (0, 0)))
        mask_i32 = jnp.pad(mask_i32, ((0, B_pad - B), (0, 0), (0, 0)))

    kernel = functools.partial(_gnn_kernel, compute_dtype=compute_dtype)

    grid_spec = pltpu.PrefetchScalarGridSpec(
        num_scalar_prefetch=0,
        grid=(B_pad // BT,),
        in_specs=[
            pl.BlockSpec((BT, N, D), lambda b: (b, 0, 0)),   # x
            pl.BlockSpec((BT, 1, N), lambda b: (b, 0, 0)),   # int32 key-padding mask
            pl.BlockSpec((D, 3 * D), lambda b: (0, 0)),      # fused [sWq^T|Wk^T|Wv^T]
            pl.BlockSpec((D, D), lambda b: (0, 0)),          # Wo^T
            pl.BlockSpec((4, D), lambda b: (0, 0)),          # bias slab (f32)
        ],
        out_specs=pl.BlockSpec((BT, N, D), lambda b: (b, 0, 0)),
    )

    out = pl.pallas_call(
        kernel,
        out_shape=jax.ShapeDtypeStruct((B_pad, N, D), jnp.float32),
        grid_spec=grid_spec,
        compiler_params=pltpu.CompilerParams(
            dimension_semantics=("parallel",),
            vmem_limit_bytes=vmem_limit),
    )(x, mask_i32, wqkv, wo, biases)

    return out[:B] if B_pad != B else out


# ----------------------------------------------------------------------------- #
# Pure-JAX reference + synthetic params + self-test
# ----------------------------------------------------------------------------- #
def gnn_reference(x, mask_bool, params):
    """Pure-JAX reference matching torch.nn.MultiheadAttention(64, 1 head)."""
    norm = jnp.sqrt(jnp.sum(x * x, axis=-1, keepdims=True)) + 1e-6
    xn = x / norm
    q = xn @ params["wq"].T + params["bq"]
    k = xn @ params["wk"].T + params["bk"]
    v = x @ params["wv"].T + params["bv"]
    scores = jnp.einsum("bqd,bkd->bqk", q, k) / jnp.sqrt(jnp.float32(EMBED))
    scores = jnp.where(mask_bool[:, None, :], scores, -jnp.inf)
    p = jax.nn.softmax(scores, axis=-1)
    attn = jnp.einsum("bqk,bkd->bqd", p, v)
    return attn @ params["wo"].T + params["bo"]


def init_params(key):
    """Deterministic synthetic parameters for MultiheadAttention(64, 1 head)."""
    ks = jax.random.split(key, 4)
    D = EMBED
    scale = 0.05
    wq = scale * jax.random.normal(ks[0], (D, D), jnp.float32)
    wk = scale * jax.random.normal(ks[1], (D, D), jnp.float32)
    wv = scale * jax.random.normal(ks[2], (D, D), jnp.float32)
    wo = scale * jax.random.normal(ks[3], (D, D), jnp.float32)
    return {
        "wq": wq, "bq": jnp.zeros((D,), jnp.float32),
        "wk": wk, "bk": jnp.full((D,), 0.01, jnp.float32),
        "wv": wv, "bv": jnp.full((D,), -0.01, jnp.float32),
        "wo": wo, "bo": jnp.full((D,), 0.02, jnp.float32),
    }


if __name__ == "__main__":
    key = jax.random.PRNGKey(0)
    k_x, k_p, k_x2, k_m2 = jax.random.split(key, 4)

    params = init_params(k_p)

    # --- Test 1: small shapes from the module spec (B=2, N=8, D=64). ---
    B, N, D = 2, 8, EMBED
    x = jax.random.normal(k_x, (B, N, D), jnp.float32)
    input_mask = jnp.array(
        [[True] * 6 + [False] * 2,
         [True] * 8],
        dtype=jnp.bool_)
    ref = gnn_reference(x, input_mask, params)

    # f32 compute path: bit-faithful to the torch math — tight tolerance.
    out_f32 = jax.block_until_ready(
        gnn_forward(x, input_mask, params, compute_dtype=jnp.float32))
    assert out_f32.shape == (B, N, D)
    assert jnp.allclose(out_f32, ref, rtol=1e-4, atol=1e-4), "f32 path mismatch (B=2)"

    # Default bf16-MXU path: looser tolerance (bf16 operands, f32 accumulation).
    out_bf16 = jax.block_until_ready(gnn_forward(x, input_mask, params))
    assert out_bf16.shape == (B, N, D)
    assert jnp.allclose(out_bf16, ref, rtol=2e-2, atol=2e-2), "bf16 path mismatch (B=2)"

    # --- Test 2: exercises divisor-based batch tiling with B=5 and a random mask. ---
    B2 = 5
    x2 = jax.random.normal(k_x2, (B2, N, D), jnp.float32)
    mask2 = jax.random.bernoulli(k_m2, 0.7, (B2, N))
    mask2 = mask2.at[:, 0].set(True)   # guarantee >=1 valid key per sequence
    ref2 = gnn_reference(x2, mask2, params)

    out2_f32 = jax.block_until_ready(
        gnn_forward(x2, mask2, params, compute_dtype=jnp.float32))
    assert out2_f32.shape == (B2, N, D)
    assert jnp.allclose(out2_f32, ref2, rtol=1e-4, atol=1e-4), "f32 path mismatch (B=5)"

    out2_bf16 = jax.block_until_ready(gnn_forward(x2, mask2, params))
    assert out2_bf16.shape == (B2, N, D)
    assert jnp.allclose(out2_bf16, ref2, rtol=2e-2, atol=2e-2), "bf16 path mismatch (B=5)"

    print("KERNEL_OK")
</pallas_src>

<mosaic_0001>
module attributes {stable_mosaic.version = 11 : i64} {
  func.func @_gnn_kernel(%arg0: i32, %arg1: memref<2x8x64xf32, #tpu.memory_space<vmem>>, %arg2: memref<2x1x8xi32, #tpu.memory_space<vmem>>, %arg3: memref<64x192xf32, #tpu.memory_space<vmem>>, %arg4: memref<64x64xf32, #tpu.memory_space<vmem>>, %arg5: memref<4x64xf32, #tpu.memory_space<vmem>>, %arg6: memref<2x8x64xf32, #tpu.memory_space<vmem>>) attributes {dimension_semantics = [#tpu.dimension_semantics<parallel>], iteration_bounds = array<i64: 1>, scalar_prefetch = 0 : i64, scratch_operands = 0 : i64, tpu.core_type = #tpu.core_type<tc>, window_params = [{transform_indices = @transform_0, window_bounds = array<i64: 2, 8, 64>}, {transform_indices = @transform_1, window_bounds = array<i64: 2, 1, 8>}, {pipeline_mode = #tpu.pipeline_mode<synchronous>, transform_indices = @transform_2, window_bounds = array<i64: 64, 192>}, {pipeline_mode = #tpu.pipeline_mode<synchronous>, transform_indices = @transform_3, window_bounds = array<i64: 64, 64>}, {pipeline_mode = #tpu.pipeline_mode<synchronous>, transform_indices = @transform_4, window_bounds = array<i64: 4, 64>}, {transform_indices = @transform_5, window_bounds = array<i64: 2, 8, 64>}]} {
    %c0 = arith.constant 0 : index
    %c0_0 = arith.constant 0 : index
    %c0_1 = arith.constant 0 : index
    %0 = vector.load %arg1[%c0, %c0_0, %c0_1] : memref<2x8x64xf32, #tpu.memory_space<vmem>>, vector<2x8x64xf32>
    %1 = vector.shape_cast %0 : vector<2x8x64xf32> to vector<16x64xf32>
    %c0_2 = arith.constant 0 : index
    %c0_3 = arith.constant 0 : index
    %2 = vector.load %arg5[%c0_2, %c0_3] : memref<4x64xf32, #tpu.memory_space<vmem>>, vector<4x64xf32>
    %3 = arith.mulf %1, %1 : vector<16x64xf32>
    %cst = arith.constant dense<0.000000e+00> : vector<16xf32>
    %4 = vector.multi_reduction <add>, %3, %cst [1] : vector<16x64xf32> to vector<16xf32>
    %5 = vector.shape_cast %4 : vector<16xf32> to vector<16x1xf32>
    %6 = math.sqrt %5 : vector<16x1xf32>
    %cst_4 = arith.constant 9.99999997E-7 : f32
    %7 = vector.broadcast %cst_4 : f32 to vector<16x1xf32>
    %8 = arith.addf %6, %7 : vector<16x1xf32>
    %9 = tpu.reciprocal %8 : vector<16x1xf32> -> vector<16x1xf32>
    %10 = vector.broadcast %9 : vector<16x1xf32> to vector<16x64xf32>
    %11 = arith.mulf %1, %10 : vector<16x64xf32>
    %c0_5 = arith.constant 0 : index
    %c0_6 = arith.constant 0 : index
    %12 = vector.load %arg3[%c0_5, %c0_6] : memref<64x192xf32, #tpu.memory_space<vmem>>, vector<64x192xf32>
    %cst_7 = arith.constant dense<0.000000e+00> : vector<16x192xf32>
    %13 = tpu.matmul %11, %12, %cst_7 {dimension_numbers = #tpu.dot_dimension_numbers<[1], [0], [0], [1], [0, 0, 1, 1], [], []>} : vector<16x64xf32>, vector<64x192xf32>, vector<16x192xf32> -> vector<16x192xf32>
    %14 = vector.extract_strided_slice %13 {offsets = [0, 0], sizes = [16, 64], strides = [1, 1]} : vector<16x192xf32> to vector<16x64xf32>
    %15 = vector.extract_strided_slice %2 {offsets = [0, 0], sizes = [1, 64], strides = [1, 1]} : vector<4x64xf32> to vector<1x64xf32>
    %16 = vector.broadcast %15 : vector<1x64xf32> to vector<16x64xf32>
    %17 = arith.addf %14, %16 : vector<16x64xf32>
    %18 = vector.extract_strided_slice %13 {offsets = [0, 64], sizes = [16, 64], strides = [1, 1]} : vector<16x192xf32> to vector<16x64xf32>
    %19 = vector.extract_strided_slice %2 {offsets = [1, 0], sizes = [1, 64], strides = [1, 1]} : vector<4x64xf32> to vector<1x64xf32>
    %20 = vector.broadcast %19 : vector<1x64xf32> to vector<16x64xf32>
    %21 = arith.addf %18, %20 : vector<16x64xf32>
    %22 = vector.extract_strided_slice %13 {offsets = [0, 128], sizes = [16, 64], strides = [1, 1]} : vector<16x192xf32> to vector<16x64xf32>
    %23 = vector.broadcast %8 : vector<16x1xf32> to vector<16x64xf32>
    %24 = arith.mulf %23, %22 : vector<16x64xf32>
    %25 = vector.extract_strided_slice %2 {offsets = [2, 0], sizes = [1, 64], strides = [1, 1]} : vector<4x64xf32> to vector<1x64xf32>
    %26 = vector.broadcast %25 : vector<1x64xf32> to vector<16x64xf32>
    %27 = arith.addf %24, %26 : vector<16x64xf32>
    %28 = vector.shape_cast %17 : vector<16x64xf32> to vector<2x8x64xf32>
    %29 = vector.shape_cast %21 : vector<16x64xf32> to vector<2x8x64xf32>
    %30 = vector.shape_cast %27 : vector<16x64xf32> to vector<2x8x64xf32>
    %cst_8 = arith.constant dense<0.000000e+00> : vector<2x8x8xf32>
    %31 = tpu.matmul %28, %29, %cst_8 {dimension_numbers = #tpu.dot_dimension_numbers<[2], [2], [1], [1], [0, 0, 0, 1, 1, 1], [0], [0]>} : vector<2x8x64xf32>, vector<2x8x64xf32>, vector<2x8x8xf32> -> vector<2x8x8xf32>
    %c0_9 = arith.constant 0 : index
    %c0_10 = arith.constant 0 : index
    %c0_11 = arith.constant 0 : index
    %32 = vector.load %arg2[%c0_9, %c0_10, %c0_11] : memref<2x1x8xi32, #tpu.memory_space<vmem>>, vector<2x1x8xi32>
    %c0_i32 = arith.constant 0 : i32
    %33 = vector.broadcast %c0_i32 : i32 to vector<2x1x8xi32>
    %34 = arith.cmpi ne, %32, %33 : vector<2x1x8xi32>
    %cst_12 = arith.constant 0.000000e+00 : f32
    %cst_13 = arith.constant -1.000000e+30 : f32
    %35 = vector.broadcast %cst_12 : f32 to vector<2x1x8xf32>
    %36 = vector.broadcast %cst_13 : f32 to vector<2x1x8xf32>
    %37 = arith.select %34, %35, %36 : vector<2x1x8xi1>, vector<2x1x8xf32>
    %38 = vector.broadcast %37 : vector<2x1x8xf32> to vector<2x8x8xf32>
    %39 = arith.addf %31, %38 : vector<2x8x8xf32>
    %cst_14 = arith.constant dense<0xFF800000> : vector<2x8xf32>
    %40 = vector.multi_reduction <maximumf>, %39, %cst_14 [2] : vector<2x8x8xf32> to vector<2x8xf32>
    %41 = vector.shape_cast %40 : vector<2x8xf32> to vector<2x8x1xf32>
    %42 = vector.broadcast %41 : vector<2x8x1xf32> to vector<2x8x8xf32>
    %43 = arith.subf %39, %42 : vector<2x8x8xf32>
    %44 = math.exp %43 : vector<2x8x8xf32>
    %cst_15 = arith.constant dense<0.000000e+00> : vector<2x8xf32>
    %45 = vector.multi_reduction <add>, %44, %cst_15 [2] : vector<2x8x8xf32> to vector<2x8xf32>
    %46 = vector.shape_cast %45 : vector<2x8xf32> to vector<2x8x1xf32>
    %47 = tpu.reciprocal %46 : vector<2x8x1xf32> -> vector<2x8x1xf32>
    %48 = vector.broadcast %47 : vector<2x8x1xf32> to vector<2x8x8xf32>
    %49 = arith.mulf %44, %48 : vector<2x8x8xf32>
    %cst_16 = arith.constant dense<0.000000e+00> : vector<2x8x64xf32>
    %50 = tpu.matmul %49, %30, %cst_16 {dimension_numbers = #tpu.dot_dimension_numbers<[2], [1], [1], [2], [0, 0, 0, 1, 1, 2], [0], [0]>} : vector<2x8x8xf32>, vector<2x8x64xf32>, vector<2x8x64xf32> -> vector<2x8x64xf32>
    %51 = vector.shape_cast %50 : vector<2x8x64xf32> to vector<16x64xf32>
    %c0_17 = arith.constant 0 : index
    %c0_18 = arith.constant 0 : index
    %52 = vector.load %arg4[%c0_17, %c0_18] : memref<64x64xf32, #tpu.memory_space<vmem>>, vector<64x64xf32>
    %cst_19 = arith.constant dense<0.000000e+00> : vector<16x64xf32>
    %53 = tpu.matmul %51, %52, %cst_19 {dimension_numbers = #tpu.dot_dimension_numbers<[1], [0], [0], [1], [0, 0, 1, 1], [], []>} : vector<16x64xf32>, vector<64x64xf32>, vector<16x64xf32> -> vector<16x64xf32>
    %54 = vector.extract_strided_slice %2 {offsets = [3, 0], sizes = [1, 64], strides = [1, 1]} : vector<4x64xf32> to vector<1x64xf32>
    %55 = vector.broadcast %54 : vector<1x64xf32> to vector<16x64xf32>
    %56 = arith.addf %53, %55 : vector<16x64xf32>
    %57 = vector.shape_cast %56 : vector<16x64xf32> to vector<2x8x64xf32>
    %c0_20 = arith.constant 0 : index
    %c0_21 = arith.constant 0 : index
    %c0_22 = arith.constant 0 : index
    %58 = vector.load %arg6[%c0_20, %c0_21, %c0_22] : memref<2x8x64xf32, #tpu.memory_space<vmem>>, vector<2x8x64xf32>
    tpu.vector_store %arg6[%c0_20, %c0_21, %c0_22], %57 {strides = array<i32>} : memref<2x8x64xf32, #tpu.memory_space<vmem>>, vector<2x8x64xf32>,
    return
  }
  func.func @transform_0(%arg0: i32) -> (i32, i32, i32) {
    %c0_i32 = arith.constant 0 : i32
    %c0_i32_0 = arith.constant 0 : i32
    %c0_i32_1 = arith.constant 0 : i32
    return %arg0, %c0_i32, %c0_i32_0 : i32, i32, i32
  }
  func.func @transform_1(%arg0: i32) -> (i32, i32, i32) {
    %c0_i32 = arith.constant 0 : i32
    %c0_i32_0 = arith.constant 0 : i32
    %c0_i32_1 = arith.constant 0 : i32
    return %arg0, %c0_i32, %c0_i32_0 : i32, i32, i32
  }
  func.func @transform_2(%arg0: i32) -> (i32, i32) {
    %c0_i32 = arith.constant 0 : i32
    %c0_i32_0 = arith.constant 0 : i32
    %c0_i32_1 = arith.constant 0 : i32
    return %c0_i32, %c0_i32_0 : i32, i32
  }
  func.func @transform_3(%arg0: i32) -> (i32, i32) {
    %c0_i32 = arith.constant 0 : i32
    %c0_i32_0 = arith.constant 0 : i32
    %c0_i32_1 = arith.constant 0 : i32
    return %c0_i32, %c0_i32_0 : i32, i32
  }
  func.func @transform_4(%arg0: i32) -> (i32, i32) {
    %c0_i32 = arith.constant 0 : i32
    %c0_i32_0 = arith.constant 0 : i32
    %c0_i32_1 = arith.constant 0 : i32
    return %c0_i32, %c0_i32_0 : i32, i32
  }
  func.func @transform_5(%arg0: i32) -> (i32, i32, i32) {
    %c0_i32 = arith.constant 0 : i32
    %c0_i32_0 = arith.constant 0 : i32
    %c0_i32_1 = arith.constant 0 : i32
    return %arg0, %c0_i32, %c0_i32_0 : i32, i32, i32
  }
}

</mosaic_0001>

<llo_original>
// kernel: gnn_forward.1
$region0: #{gnn_forward.1}
  #allocation0 [shape = 'u32[]', space=smem, size = 0x4, offset = 0x4, fixed_abs, tag = 'smem constant byte address 0x4 - core index']
  #allocation1 [shape = 'u32[144,128]{1,0:T(1,128)}', space=vmem, size = 0x12000, scoped, tag = 'internal scratch']
  %s0 = inlined_call_operand.vmem [shape: f32[2,8,64], index: 0, kind: input, shape index: {}]
  %s1 = inlined_call_operand.vmem [shape: s32[2,1,8], index: 1, kind: input, shape index: {}]
  %s2 = inlined_call_operand.vmem [shape: f32[64,192], index: 2, kind: input, shape index: {}]
  %s3 = inlined_call_operand.vmem [shape: f32[64,64], index: 3, kind: input, shape index: {}]
  %s4 = inlined_call_operand.vmem [shape: f32[4,64], index: 4, kind: input, shape index: {}]
  %s5 = inlined_call_operand.hbm [shape: f32[2,8,64], index: 5, kind: output, shape index: {}]
  %s6 = sld [smem:[#allocation0]]
  $region30: #{gnn_forward.1} parent=0
    _
  %s8 = ssub.s32 1, %s6
  %s9 = scalar_select 0, %s8, %s6
  $region1: #{gnn_forward.1} parent=0
    #allocation2 [shape = 'u8[8192]{0}', space=vmem, size = 0x2000, scoped, tag = 'output window, operand 0, single buffered']
    #allocation3 [shape = 's32[1]{0}', space=sflag, size = 0x4, scoped, tag = 'scoped memory for gnn_forward.1']
    %10 = vsyncpa [#allocation3], 0
    // Predicated region
    $region2: #{gnn_forward.1} parent=1 // pred_check
      _
    $region3: #{gnn_forward.1} parent=1 // pred_check_branch
      %12 = sbr.rel (0) target = $region5
    $region4: #{gnn_forward.1} parent=1 // pred_region
      _
    $region5: #{gnn_forward.1} parent=1 // pred_fallthru
      _
    // Predicated region
    $region6: #{gnn_forward.1} parent=1 // pred_check
      _
    $region7: #{gnn_forward.1} parent=1 // pred_check_branch
      %14 = sbr.rel (0) target = $region9
    $region8: #{gnn_forward.1} parent=1 // pred_region
      _
    $region9: #{gnn_forward.1} parent=1 // pred_fallthru
      _
    // Predicated region
    $region10: #{gnn_forward.1} parent=1 // pred_check
      _
    $region11: #{gnn_forward.1} parent=1 // pred_check_branch
      %16 = sbr.rel (0) target = $region13
    $region12: #{gnn_forward.1} parent=1 // pred_region
      _
    $region13: #{gnn_forward.1} parent=1 // pred_fallthru
      _
    // Predicated region
    $region14: #{gnn_forward.1} parent=1 // pred_check
      _
    $region15: #{gnn_forward.1} parent=1 // pred_check_branch
      %18 = sbr.rel (0) target = $region17
    $region16: #{gnn_forward.1} parent=1 // pred_region
      _
    $region17: #{gnn_forward.1} parent=1 // pred_fallthru
      _
    // Predicated region
    $region18: #{gnn_forward.1} parent=1 // pred_check
      _
    $region19: #{gnn_forward.1} parent=1 // pred_check_branch
      %20 = sbr.rel (0) target = $region21
    $region20: #{gnn_forward.1} parent=1 // pred_region
      _
    $region21: #{gnn_forward.1} parent=1 // pred_fallthru
      _
    %v21 = vld [vmem:[%s0] sm:$0xff]
    %v22 = vld [vmem:[%s0 + $0x8] sm:$0xff]
    %v23 = vld [vmem:[%s4] sm:$0xf]
    %v24 = vmul.f32 %v21, %v21
    %v25 = vmul.f32 %v22, %v22
    %vm26 = vcmask 523264
    %v27 = vsel %vm26, %v24, 0.0
    %28 = vadd.xlane.f32.xlu0 %v27
    %v29 = vpop.xlane.xlu0 %28
    %v30 = vsel %vm26, %v25, 0.0
    %31 = vadd.xlane.f32.xlu0 %v30
    %v32 = vpop.xlane.xlu0 %31
    %v33 = vrsqrt.pop %v29
    %v34 = vmul.f32 %v29, %v33
    %vm35 = vcmp.eq.f32.partialorder %v29, inf
    %v36 = vsel %vm35, %v29, %v34
    %vm37 = vcmp.eq.f32.partialorder %v29, 0.0
    %v38 = vand.u32 %v29, 2147483648
    %v39 = vsel %vm37, %v38, %v36
    %v40 = vrsqrt.pop %v32
    %v41 = vmul.f32 %v32, %v40
    %vm42 = vcmp.eq.f32.partialorder %v32, inf
    %v43 = vsel %vm42, %v32, %v41
    %vm44 = vcmp.eq.f32.partialorder %v32, 0.0
    %v45 = vand.u32 %v32, 2147483648
    %v46 = vsel %vm44, %v45, %v43
    %v47 = vadd.f32 %v39, 1e-06
    %v48 = vadd.f32 %v46, 1e-06
    %v49 = vrcp.pop %v47
    %v50 = vrcp.pop %v48
    %v51 = vmul.f32 %v21, %v49
    %v52 = vmul.f32 %v22, %v50
    %v53 = vld [vmem:[%s2] sm:$0xff]
    %v54 = vld [vmem:[%s2 + $0x8] sm:$0xff]
    %v55 = vld [vmem:[%s2 + $0x10] sm:$0xff]
    %v56 = vld [vmem:[%s2 + $0x18] sm:$0xff]
    %v57 = vld [vmem:[%s2 + $0x20] sm:$0xff]
    %v58 = vld [vmem:[%s2 + $0x28] sm:$0xff]
    %v59 = vld [vmem:[%s2 + $0x30] sm:$0xff]
    %v60 = vld [vmem:[%s2 + $0x38] sm:$0xff]
    %v61 = vld [vmem:[%s2 + $0x40] sm:$0xff]
    %v62 = vld [vmem:[%s2 + $0x48] sm:$0xff]
    %v63 = vld [vmem:[%s2 + $0x50] sm:$0xff]
    %v64 = vld [vmem:[%s2 + $0x58] sm:$0xff]
    %v65 = vld [vmem:[%s2 + $0x60] sm:$0xff]
    %v66 = vld [vmem:[%s2 + $0x68] sm:$0xff]
    %v67 = vld [vmem:[%s2 + $0x70] sm:$0xff]
    %v68 = vld [vmem:[%s2 + $0x78] sm:$0xff]
    %v70 = vsel %vm26, %v51, 0
    %v73 = vsel %vm26, %v52, 0
    %75 = vmatprep.subr.mxu0 %v54
    %76 = vmatpush1.msra.mxu0 %v53
    %77 = vmatprep.subr.mxu0 %v56
    %78 = vmatpush1.msra.mxu0 %v55
    %79 = vmatprep.subr.mxu0 %v58
    %80 = vmatpush1.msra.mxu0 %v57
    %81 = vmatprep.subr.mxu0 %v60
    %82 = vmatpush1.msra.mxu0 %v59
    %83 = vmatprep.subr.mxu0 %v62
    %84 = vmatpush1.msra.mxu0 %v61
    %85 = vmatprep.subr.mxu0 %v64
    %86 = vmatpush1.msra.mxu0 %v63
    %87 = vmatprep.subr.mxu0 %v66
    %88 = vmatpush1.msra.mxu0 %v65
    %89 = vmatprep.subr.mxu0 %v68
    %90 = vmatpush1.msra.mxu0 %v67
    %91 = vmatprep.subr.mxu0 0.0
    %92 = vmatpush1.msra.mxu0 0.0
    %93 = vmatprep.subr.mxu0 0.0
    %94 = vmatpush1.msra.mxu0 0.0
    %95 = vmatprep.subr.mxu0 0.0
    %96 = vmatpush1.msra.mxu0 0.0
    %97 = vmatprep.subr.mxu0 0.0
    %98 = vmatpush1.msra.mxu0 0.0
    %99 = vmatprep.subr.mxu0 0.0
    %100 = vmatpush1.msra.mxu0 0.0
    %101 = vmatprep.subr.mxu0 0.0
    %102 = vmatpush1.msra.mxu0 0.0
    %103 = vmatprep.subr.mxu0 0.0
    %104 = vmatpush1.msra.mxu0 0.0
    %105 = vmatprep.subr.mxu0 0.0
    %106 = vmatpush1.msra.mxu0 0.0
    %107 = vmatprep.subr.mxu0 0.0
    %108 = vmatpush1.msra.mxu0 0.0
    %109 = vmatprep.subr.mxu0 0.0
    %110 = vmatpush1.msra.mxu0 0.0
    %111 = vmatprep.subr.mxu0 0.0
    %112 = vmatpush1.msra.mxu0 0.0
    %113 = vmatprep.subr.mxu0 0.0
    %114 = vmatpush1.msra.mxu0 0.0
    %115 = vmatprep.subr.mxu0 0.0
    %116 = vmatpush1.msra.mxu0 0.0
    %117 = vmatprep.subr.mxu0 0.0
    %118 = vmatpush1.msra.mxu0 0.0
    %119 = vmatprep.subr.mxu0 0.0
    %120 = vmatpush1.msra.mxu0 0.0
    %121 = vmatprep.subr.mxu0 0.0
    %122 = vmatpush1.msra.mxu0 0.0
    %123 = vmatprep.subr.mxu0 0.0
    %124 = vmatpush1.msra.mxu0 0.0
    %125 = vmatprep.subr.mxu0 0.0
    %126 = vmatpush1.msra.mxu0 0.0
    %127 = vmatprep.subr.mxu0 0.0
    %128 = vmatpush1.msra.mxu0 0.0
    %129 = vmatprep.subr.mxu0 0.0
    %130 = vmatpush1.msra.mxu0 0.0
    %131 = vmatprep.subr.mxu0 0.0
    %132 = vmatpush1.msra.mxu0 0.0
    %133 = vmatprep.subr.mxu0 0.0
    %134 = vmatpush1.msra.mxu0 0.0
    %135 = vmatprep.subr.mxu0 0.0
    %136 = vmatpush1.msra.mxu0 0.0
    %137 = vmatprep.subr.mxu0 0.0
    %138 = vmatpush1.msra.mxu0 0.0
    %139 = vmatprep.mubr.f32.mxu0 0.0
    %140 = vmatmul.mubr.f32.gmra.mrb[0].mxu0 %v70
    %v141 = vpop.f32.mrb[0].mxu0
    %v142 = vadd.f32 0.0, %v141
    %v143 = vpop.f32.mrb[0].mxu0
    %v144 = vadd.f32 0.0, %v143
    %145 = vmatprep.mubr.f32.mxu0 0.0
    %146 = vmatmul.mubr.f32.gmra.mrb[0].mxu0 %v73
    %v147 = vpop.f32.mrb[0].mxu0
    %v148 = vadd.f32 0.0, %v147
    %v149 = vpop.f32.mrb[0].mxu0
    %v150 = vadd.f32 0.0, %v149
    %151 = vdwg.mxu0
    %v152 = vlaneseq
    %v153 = vshrl.u32 %v152, 7
    %v154 = vsub.s32 0, %v153
    %v155 = vrot.slane %v23, %v154
    %v156 = vadd.f32 %v142, %v155
    %v157 = vadd.f32 %v148, %v155
    %v158 = vlaneseq
    %v159 = vshrl.u32 %v158, 7
    %v160 = vsub.s32 1, %v159
    %v161 = vrot.slane %v23, %v160
    %163 = vrot.lane.b32.xlu0 %v161, 64
    %v164 = vpop.permute.xlu0 %163
    %v166 = vadd.f32 %v142, %v164
    %v167 = vadd.f32 %v148, %v164
    %v168 = vmul.f32 %v47, %v144
    %v169 = vmul.f32 %v48, %v150
    %v170 = vlaneseq
    %v171 = vshrl.u32 %v170, 7
    %v172 = vsub.s32 2, %v171
    %v173 = vrot.slane %v23, %v172
    %v174 = vadd.f32 %v168, %v173
    %v175 = vadd.f32 %v169, %v173
    %v176 = vld [vmem:[%s1] sm:$0x1]
    %v177 = vld [vmem:[%s1 + $0x1] sm:$0x1]
    %vm178 = vcmp.ne.s32.totalorder %v176, 0
    %vm179 = vcmp.ne.s32.totalorder %v177, 0
    %v180 = vsel %vm178, 0.0, -1e+30
    %v181 = vsel %vm179, 0.0, -1e+30
    %v184 = vlaneseq
    %v185 = vshrl.u32 %v184, 7
    %v186 = vsub.s32 0, %v185
    %v187 = vrot.slane %v180, %v186
    %v188 = vlaneseq
    %v189 = vshrl.u32 %v188, 7
    %v190 = vsub.s32 0, %v189
    %v191 = vrot.slane %v181, %v190
    %195 = vrot.lane.b32.xlu0 %v166, 64
    %v196 = vpop.permute.xlu0 %195
    %v198 = vsel %vm26, %v156, 0
    %v200 = vsel %vm26, %v196, 0
    %202 = vmatprep.subr.mxu0 0.0
    %203 = vmatpush1.xpose.msra.mxu0 %v200
    %204 = vmatprep.subr.mxu0 0.0
    %205 = vmatpush1.xpose.msra.mxu0 0.0
    %206 = vmatprep.subr.mxu0 0.0
    %207 = vmatpush1.xpose.msra.mxu0 0.0
    %208 = vmatprep.subr.mxu0 0.0
    %209 = vmatpush1.xpose.msra.mxu0 0.0
    %210 = vmatprep.subr.mxu0 0.0
    %211 = vmatpush1.xpose.msra.mxu0 0.0
    %212 = vmatprep.subr.mxu0 0.0
    %213 = vmatpush1.xpose.msra.mxu0 0.0
    %214 = vmatprep.subr.mxu0 0.0
    %215 = vmatpush1.xpose.msra.mxu0 0.0
    %216 = vmatprep.subr.mxu0 0.0
    %217 = vmatpush1.xpose.msra.mxu0 0.0
    %218 = vmatprep.subr.mxu0 0.0
    %219 = vmatpush1.xpose.msra.mxu0 0.0
    %220 = vmatprep.subr.mxu0 0.0
    %221 = vmatpush1.xpose.msra.mxu0 0.0
    %222 = vmatprep.subr.mxu0 0.0
    %223 = vmatpush1.xpose.msra.mxu0 0.0
    %224 = vmatprep.subr.mxu0 0.0
    %225 = vmatpush1.xpose.msra.mxu0 0.0
    %226 = vmatprep.subr.mxu0 0.0
    %227 = vmatpush1.xpose.msra.mxu0 0.0
    %228 = vmatprep.subr.mxu0 0.0
    %229 = vmatpush1.xpose.msra.mxu0 0.0
    %230 = vmatprep.subr.mxu0 0.0
    %231 = vmatpush1.xpose.msra.mxu0 0.0
    %232 = vmatprep.subr.mxu0 0.0
    %233 = vmatpush1.xpose.msra.mxu0 0.0
    %234 = vmatprep.subr.mxu0 0.0
    %235 = vmatpush1.xpose.msra.mxu0 0.0
    %236 = vmatprep.subr.mxu0 0.0
    %237 = vmatpush1.xpose.msra.mxu0 0.0
    %238 = vmatprep.subr.mxu0 0.0
    %239 = vmatpush1.xpose.msra.mxu0 0.0
    %240 = vmatprep.subr.mxu0 0.0
    %241 = vmatpush1.xpose.msra.mxu0 0.0
    %242 = vmatprep.subr.mxu0 0.0
    %243 = vmatpush1.xpose.msra.mxu0 0.0
    %244 = vmatprep.subr.mxu0 0.0
    %245 = vmatpush1.xpose.msra.mxu0 0.0
    %246 = vmatprep.subr.mxu0 0.0
    %247 = vmatpush1.xpose.msra.mxu0 0.0
    %248 = vmatprep.subr.mxu0 0.0
    %249 = vmatpush1.xpose.msra.mxu0 0.0
    %250 = vmatprep.subr.mxu0 0.0
    %251 = vmatpush1.xpose.msra.mxu0 0.0
    %252 = vmatprep.subr.mxu0 0.0
    %253 = vmatpush1.xpose.msra.mxu0 0.0
    %254 = vmatprep.subr.mxu0 0.0
    %255 = vmatpush1.xpose.msra.mxu0 0.0
    %256 = vmatprep.subr.mxu0 0.0
    %257 = vmatpush1.xpose.msra.mxu0 0.0
    %258 = vmatprep.subr.mxu0 0.0
    %259 = vmatpush1.xpose.msra.mxu0 0.0
    %260 = vmatprep.subr.mxu0 0.0
    %261 = vmatpush1.xpose.msra.mxu0 0.0
    %262 = vmatprep.subr.mxu0 0.0
    %263 = vmatpush1.xpose.msra.mxu0 0.0
    %264 = vmatprep.subr.mxu0 0.0
    %265 = vmatpush1.xpose.msra.mxu0 0.0
    %266 = vmatprep.mubr.f32.mxu0 0.0
    %267 = vmatmul.mubr.f32.gmra.mrb[0].mxu0 %v198
    %v268 = vpop.f32.mrb[0].mxu0
    %v269 = vadd.f32 %v187, %v268
    %v270 = vpop.f32.mrb[0].mxu0
    %271 = vdwg.mxu0
    %273 = vrot.lane.b32.xlu0 %v167, 64
    %v274 = vpop.permute.xlu0 %273
    %v276 = vsel %vm26, %v157, 0
    %v278 = vsel %vm26, %v274, 0
    %280 = vmatprep.subr.mxu0 0.0
    %281 = vmatpush1.xpose.msra.mxu0 %v278
    %282 = vmatprep.subr.mxu0 0.0
    %283 = vmatpush1.xpose.msra.mxu0 0.0
    %284 = vmatprep.subr.mxu0 0.0
    %285 = vmatpush1.xpose.msra.mxu0 0.0
    %286 = vmatprep.subr.mxu0 0.0
    %287 = vmatpush1.xpose.msra.mxu0 0.0
    %288 = vmatprep.subr.mxu0 0.0
    %289 = vmatpush1.xpose.msra.mxu0 0.0
    %290 = vmatprep.subr.mxu0 0.0
    %291 = vmatpush1.xpose.msra.mxu0 0.0
    %292 = vmatprep.subr.mxu0 0.0
    %293 = vmatpush1.xpose.msra.mxu0 0.0
    %294 = vmatprep.subr.mxu0 0.0
    %295 = vmatpush1.xpose.msra.mxu0 0.0
    %296 = vmatprep.subr.mxu0 0.0
    %297 = vmatpush1.xpose.msra.mxu0 0.0
    %298 = vmatprep.subr.mxu0 0.0
    %299 = vmatpush1.xpose.msra.mxu0 0.0
    %300 = vmatprep.subr.mxu0 0.0
    %301 = vmatpush1.xpose.msra.mxu0 0.0
    %302 = vmatprep.subr.mxu0 0.0
    %303 = vmatpush1.xpose.msra.mxu0 0.0
    %304 = vmatprep.subr.mxu0 0.0
    %305 = vmatpush1.xpose.msra.mxu0 0.0
    %306 = vmatprep.subr.mxu0 0.0
    %307 = vmatpush1.xpose.msra.mxu0 0.0
    %308 = vmatprep.subr.mxu0 0.0
    %309 = vmatpush1.xpose.msra.mxu0 0.0
    %310 = vmatprep.subr.mxu0 0.0
    %311 = vmatpush1.xpose.msra.mxu0 0.0
    %312 = vmatprep.subr.mxu0 0.0
    %313 = vmatpush1.xpose.msra.mxu0 0.0
    %314 = vmatprep.subr.mxu0 0.0
    %315 = vmatpush1.xpose.msra.mxu0 0.0
    %316 = vmatprep.subr.mxu0 0.0
    %317 = vmatpush1.xpose.msra.mxu0 0.0
    %318 = vmatprep.subr.mxu0 0.0
    %319 = vmatpush1.xpose.msra.mxu0 0.0
    %320 = vmatprep.subr.mxu0 0.0
    %321 = vmatpush1.xpose.msra.mxu0 0.0
    %322 = vmatprep.subr.mxu0 0.0
    %323 = vmatpush1.xpose.msra.mxu0 0.0
    %324 = vmatprep.subr.mxu0 0.0
    %325 = vmatpush1.xpose.msra.mxu0 0.0
    %326 = vmatprep.subr.mxu0 0.0
    %327 = vmatpush1.xpose.msra.mxu0 0.0
    %328 = vmatprep.subr.mxu0 0.0
    %329 = vmatpush1.xpose.msra.mxu0 0.0
    %330 = vmatprep.subr.mxu0 0.0
    %331 = vmatpush1.xpose.msra.mxu0 0.0
    %332 = vmatprep.subr.mxu0 0.0
    %333 = vmatpush1.xpose.msra.mxu0 0.0
    %334 = vmatprep.subr.mxu0 0.0
    %335 = vmatpush1.xpose.msra.mxu0 0.0
    %336 = vmatprep.subr.mxu0 0.0
    %337 = vmatpush1.xpose.msra.mxu0 0.0
    %338 = vmatprep.subr.mxu0 0.0
    %339 = vmatpush1.xpose.msra.mxu0 0.0
    %340 = vmatprep.subr.mxu0 0.0
    %341 = vmatpush1.xpose.msra.mxu0 0.0
    %342 = vmatprep.subr.mxu0 0.0
    %343 = vmatpush1.xpose.msra.mxu0 0.0
    %344 = vmatprep.mubr.f32.mxu0 0.0
    %345 = vmatmul.mubr.f32.gmra.mrb[0].mxu0 %v276
    %v346 = vpop.f32.mrb[0].mxu0
    %v347 = vadd.f32 %v191, %v346
    %v348 = vpop.f32.mrb[0].mxu0
    %349 = vdwg.mxu0
    %vm350 = vcmask 64512
    %v351 = vsel %vm350, %v269, -inf
    %352 = vmax.xlane.f32.xlu0 %v351
    %v353 = vpop.xlane.xlu0 %352
    %v354 = vsel %vm350, %v347, -inf
    %355 = vmax.xlane.f32.xlu0 %v354
    %v356 = vpop.xlane.xlu0 %355
    %v357 = vsub.f32 %v269, %v353
    %v358 = vsub.f32 %v347, %v356
    %v359 = vmul.f32 %v357, 1.442695
    %v360 = vpow.pop %v359
    %v361 = vmul.f32 %v358, 1.442695
    %v362 = vpow.pop %v361
    %v363 = vsel %vm350, %v360, 0.0
    %364 = vadd.xlane.f32.xlu0 %v363
    %v365 = vpop.xlane.xlu0 %364
    %v366 = vsel %vm350, %v362, 0.0
    %367 = vadd.xlane.f32.xlu0 %v366
    %v368 = vpop.xlane.xlu0 %367
    %v369 = vrcp.pop %v365
    %v370 = vrcp.pop %v368
    %v371 = vmul.f32 %v360, %v369
    %v372 = vmul.f32 %v362, %v370
    %v374 = vsel %vm350, %v371, 0
    %376 = vmatprep.subr.mxu0 0.0
    %377 = vmatpush1.msra.mxu0 %v174
    %378 = vmatprep.subr.mxu0 0.0
    %379 = vmatpush1.msra.mxu0 0.0
    %380 = vmatprep.subr.mxu0 0.0
    %381 = vmatpush1.msra.mxu0 0.0
    %382 = vmatprep.subr.mxu0 0.0
    %383 = vmatpush1.msra.mxu0 0.0
    %384 = vmatprep.subr.mxu0 0.0
    %385 = vmatpush1.msra.mxu0 0.0
    %386 = vmatprep.subr.mxu0 0.0
    %387 = vmatpush1.msra.mxu0 0.0
    %388 = vmatprep.subr.mxu0 0.0
    %389 = vmatpush1.msra.mxu0 0.0
    %390 = vmatprep.subr.mxu0 0.0
    %391 = vmatpush1.msra.mxu0 0.0
    %392 = vmatprep.subr.mxu0 0.0
    %393 = vmatpush1.msra.mxu0 0.0
    %394 = vmatprep.subr.mxu0 0.0
    %395 = vmatpush1.msra.mxu0 0.0
    %396 = vmatprep.subr.mxu0 0.0
    %397 = vmatpush1.msra.mxu0 0.0
    %398 = vmatprep.subr.mxu0 0.0
    %399 = vmatpush1.msra.mxu0 0.0
    %400 = vmatprep.subr.mxu0 0.0
    %401 = vmatpush1.msra.mxu0 0.0
    %402 = vmatprep.subr.mxu0 0.0
    %403 = vmatpush1.msra.mxu0 0.0
    %404 = vmatprep.subr.mxu0 0.0
    %405 = vmatpush1.msra.mxu0 0.0
    %406 = vmatprep.subr.mxu0 0.0
    %407 = vmatpush1.msra.mxu0 0.0
    %408 = vmatprep.subr.mxu0 0.0
    %409 = vmatpush1.msra.mxu0 0.0
    %410 = vmatprep.subr.mxu0 0.0
    %411 = vmatpush1.msra.mxu0 0.0
    %412 = vmatprep.subr.mxu0 0.0
    %413 = vmatpush1.msra.mxu0 0.0
    %414 = vmatprep.subr.mxu0 0.0
    %415 = vmatpush1.msra.mxu0 0.0
    %416 = vmatprep.subr.mxu0 0.0
    %417 = vmatpush1.msra.mxu0 0.0
    %418 = vmatprep.subr.mxu0 0.0
    %419 = vmatpush1.msra.mxu0 0.0
    %420 = vmatprep.subr.mxu0 0.0
    %421 = vmatpush1.msra.mxu0 0.0
    %422 = vmatprep.subr.mxu0 0.0
    %423 = vmatpush1.msra.mxu0 0.0
    %424 = vmatprep.subr.mxu0 0.0
    %425 = vmatpush1.msra.mxu0 0.0
    %426 = vmatprep.subr.mxu0 0.0
    %427 = vmatpush1.msra.mxu0 0.0
    %428 = vmatprep.subr.mxu0 0.0
    %429 = vmatpush1.msra.mxu0 0.0
    %430 = vmatprep.subr.mxu0 0.0
    %431 = vmatpush1.msra.mxu0 0.0
    %432 = vmatprep.subr.mxu0 0.0
    %433 = vmatpush1.msra.mxu0 0.0
    %434 = vmatprep.subr.mxu0 0.0
    %435 = vmatpush1.msra.mxu0 0.0
    %436 = vmatprep.subr.mxu0 0.0
    %437 = vmatpush1.msra.mxu0 0.0
    %438 = vmatprep.subr.mxu0 0.0
    %439 = vmatpush1.msra.mxu0 0.0
    %440 = vmatprep.mubr.f32.mxu0 0.0
    %441 = vmatmul.mubr.f32.gmra.mrb[0].mxu0 %v374
    %v442 = vpop.f32.mrb[0].mxu0
    %v443 = vadd.f32 0.0, %v442
    %v444 = vpop.f32.mrb[0].mxu0
    %445 = vdwg.mxu0
    %v447 = vsel %vm350, %v372, 0
    %449 = vmatprep.subr.mxu0 0.0
    %450 = vmatpush1.msra.mxu0 %v175
    %451 = vmatprep.subr.mxu0 0.0
    %452 = vmatpush1.msra.mxu0 0.0
    %453 = vmatprep.subr.mxu0 0.0
    %454 = vmatpush1.msra.mxu0 0.0
    %455 = vmatprep.subr.mxu0 0.0
    %456 = vmatpush1.msra.mxu0 0.0
    %457 = vmatprep.subr.mxu0 0.0
    %458 = vmatpush1.msra.mxu0 0.0
    %459 = vmatprep.subr.mxu0 0.0
    %460 = vmatpush1.msra.mxu0 0.0
    %461 = vmatprep.subr.mxu0 0.0
    %462 = vmatpush1.msra.mxu0 0.0
    %463 = vmatprep.subr.mxu0 0.0
    %464 = vmatpush1.msra.mxu0 0.0
    %465 = vmatprep.subr.mxu0 0.0
    %466 = vmatpush1.msra.mxu0 0.0
    %467 = vmatprep.subr.mxu0 0.0
    %468 = vmatpush1.msra.mxu0 0.0
    %469 = vmatprep.subr.mxu0 0.0
    %470 = vmatpush1.msra.mxu0 0.0
    %471 = vmatprep.subr.mxu0 0.0
    %472 = vmatpush1.msra.mxu0 0.0
    %473 = vmatprep.subr.mxu0 0.0
    %474 = vmatpush1.msra.mxu0 0.0
    %475 = vmatprep.subr.mxu0 0.0
    %476 = vmatpush1.msra.mxu0 0.0
    %477 = vmatprep.subr.mxu0 0.0
    %478 = vmatpush1.msra.mxu0 0.0
    %479 = vmatprep.subr.mxu0 0.0
    %480 = vmatpush1.msra.mxu0 0.0
    %481 = vmatprep.subr.mxu0 0.0
    %482 = vmatpush1.msra.mxu0 0.0
    %483 = vmatprep.subr.mxu0 0.0
    %484 = vmatpush1.msra.mxu0 0.0
    %485 = vmatprep.subr.mxu0 0.0
    %486 = vmatpush1.msra.mxu0 0.0
    %487 = vmatprep.subr.mxu0 0.0
    %488 = vmatpush1.msra.mxu0 0.0
    %489 = vmatprep.subr.mxu0 0.0
    %490 = vmatpush1.msra.mxu0 0.0
    %491 = vmatprep.subr.mxu0 0.0
    %492 = vmatpush1.msra.mxu0 0.0
    %493 = vmatprep.subr.mxu0 0.0
    %494 = vmatpush1.msra.mxu0 0.0
    %495 = vmatprep.subr.mxu0 0.0
    %496 = vmatpush1.msra.mxu0 0.0
    %497 = vmatprep.subr.mxu0 0.0
    %498 = vmatpush1.msra.mxu0 0.0
    %499 = vmatprep.subr.mxu0 0.0
    %500 = vmatpush1.msra.mxu0 0.0
    %501 = vmatprep.subr.mxu0 0.0
    %502 = vmatpush1.msra.mxu0 0.0
    %503 = vmatprep.subr.mxu0 0.0
    %504 = vmatpush1.msra.mxu0 0.0
    %505 = vmatprep.subr.mxu0 0.0
    %506 = vmatpush1.msra.mxu0 0.0
    %507 = vmatprep.subr.mxu0 0.0
    %508 = vmatpush1.msra.mxu0 0.0
    %509 = vmatprep.subr.mxu0 0.0
    %510 = vmatpush1.msra.mxu0 0.0
    %511 = vmatprep.subr.mxu0 0.0
    %512 = vmatpush1.msra.mxu0 0.0
    %513 = vmatprep.mubr.f32.mxu0 0.0
    %514 = vmatmul.mubr.f32.gmra.mrb[0].mxu0 %v447
    %v515 = vpop.f32.mrb[0].mxu0
    %v516 = vadd.f32 0.0, %v515
    %v517 = vpop.f32.mrb[0].mxu0
    %518 = vdwg.mxu0
    %v519 = vld [vmem:[%s3] sm:$0xff]
    %v520 = vld [vmem:[%s3 + $0x8] sm:$0xff]
    %v521 = vld [vmem:[%s3 + $0x10] sm:$0xff]
    %v522 = vld [vmem:[%s3 + $0x18] sm:$0xff]
    %v523 = vld [vmem:[%s3 + $0x20] sm:$0xff]
    %v524 = vld [vmem:[%s3 + $0x28] sm:$0xff]
    %v525 = vld [vmem:[%s3 + $0x30] sm:$0xff]
    %v526 = vld [vmem:[%s3 + $0x38] sm:$0xff]
    %v527 = vlaneseq
    %v528 = vshrl.u32 %v527, 7
    %v529 = vsub.s32 3, %v528
    %v530 = vrot.slane %v23, %v529
    %v532 = vsel %vm26, %v443, 0
    %v535 = vsel %vm26, %v516, 0
    %537 = vmatprep.subr.mxu0 0.0
    %538 = vmatpush1.msra.mxu0 %v519
    %539 = vmatprep.subr.mxu0 0.0
    %540 = vmatpush1.msra.mxu0 %v520
    %541 = vmatprep.subr.mxu0 0.0
    %542 = vmatpush1.msra.mxu0 %v521
    %543 = vmatprep.subr.mxu0 0.0
    %544 = vmatpush1.msra.mxu0 %v522
    %545 = vmatprep.subr.mxu0 0.0
    %546 = vmatpush1.msra.mxu0 %v523
    %547 = vmatprep.subr.mxu0 0.0
    %548 = vmatpush1.msra.mxu0 %v524
    %549 = vmatprep.subr.mxu0 0.0
    %550 = vmatpush1.msra.mxu0 %v525
    %551 = vmatprep.subr.mxu0 0.0
    %552 = vmatpush1.msra.mxu0 %v526
    %553 = vmatprep.subr.mxu0 0.0
    %554 = vmatpush1.msra.mxu0 0.0
    %555 = vmatprep.subr.mxu0 0.0
    %556 = vmatpush1.msra.mxu0 0.0
    %557 = vmatprep.subr.mxu0 0.0
    %558 = vmatpush1.msra.mxu0 0.0
    %559 = vmatprep.subr.mxu0 0.0
    %560 = vmatpush1.msra.mxu0 0.0
    %561 = vmatprep.subr.mxu0 0.0
    %562 = vmatpush1.msra.mxu0 0.0
    %563 = vmatprep.subr.mxu0 0.0
    %564 = vmatpush1.msra.mxu0 0.0
    %565 = vmatprep.subr.mxu0 0.0
    %566 = vmatpush1.msra.mxu0 0.0
    %567 = vmatprep.subr.mxu0 0.0
    %568 = vmatpush1.msra.mxu0 0.0
    %569 = vmatprep.subr.mxu0 0.0
    %570 = vmatpush1.msra.mxu0 0.0
    %571 = vmatprep.subr.mxu0 0.0
    %572 = vmatpush1.msra.mxu0 0.0
    %573 = vmatprep.subr.mxu0 0.0
    %574 = vmatpush1.msra.mxu0 0.0
    %575 = vmatprep.subr.mxu0 0.0
    %576 = vmatpush1.msra.mxu0 0.0
    %577 = vmatprep.subr.mxu0 0.0
    %578 = vmatpush1.msra.mxu0 0.0
    %579 = vmatprep.subr.mxu0 0.0
    %580 = vmatpush1.msra.mxu0 0.0
    %581 = vmatprep.subr.mxu0 0.0
    %582 = vmatpush1.msra.mxu0 0.0
    %583 = vmatprep.subr.mxu0 0.0
    %584 = vmatpush1.msra.mxu0 0.0
    %585 = vmatprep.subr.mxu0 0.0
    %586 = vmatpush1.msra.mxu0 0.0
    %587 = vmatprep.subr.mxu0 0.0
    %588 = vmatpush1.msra.mxu0 0.0
    %589 = vmatprep.subr.mxu0 0.0
    %590 = vmatpush1.msra.mxu0 0.0
    %591 = vmatprep.subr.mxu0 0.0
    %592 = vmatpush1.msra.mxu0 0.0
    %593 = vmatprep.subr.mxu0 0.0
    %594 = vmatpush1.msra.mxu0 0.0
    %595 = vmatprep.subr.mxu0 0.0
    %596 = vmatpush1.msra.mxu0 0.0
    %597 = vmatprep.subr.mxu0 0.0
    %598 = vmatpush1.msra.mxu0 0.0
    %599 = vmatprep.subr.mxu0 0.0
    %600 = vmatpush1.msra.mxu0 0.0
    %601 = vmatprep.mubr.f32.mxu0 0.0
    %602 = vmatmul.mubr.f32.gmra.mrb[0].mxu0 %v532
    %v603 = vpop.f32.mrb[0].mxu0
    %v604 = vadd.f32 %v530, %v603
    %v605 = vpop.f32.mrb[0].mxu0
    %606 = vmatprep.mubr.f32.mxu0 0.0
    %607 = vmatmul.mubr.f32.gmra.mrb[0].mxu0 %v535
    %v608 = vpop.f32.mrb[0].mxu0
    %v609 = vadd.f32 %v530, %v608
    %v610 = vpop.f32.mrb[0].mxu0
    %611 = vdwg.mxu0
    %612 = vst.msk [vmem:[#allocation2] sm:$0xff] %vm26, %v604
    %613 = vst.msk [vmem:[#allocation2 + $0x8] sm:$0xff] %vm26, %v609
    // Predicated region
    $region22: #{gnn_forward.1} parent=1 // pred_check
      _
    $region23: #{gnn_forward.1} parent=1 // pred_check_branch
      %615 = sbr.rel (0) target = $region25
    $region24: #{gnn_forward.1} parent=1 // pred_region
      %s617 = ssub.s32 256, 256
      %618 = vsyncadd [#allocation3], %s617
      %s619 = sshll.u32 [#allocation2], 4
      %s620 = int_to_ptr.vmem [resolvable:$true] %s619
      %625 = dma.vmem_to_hbm [thread:$0]  %s620, 256, %s5, [#allocation3], 128, 128, 8
    $region25: #{gnn_forward.1} parent=1 // pred_fallthru
      _
    // Predicated region
    $region26: #{gnn_forward.1} parent=1 // pred_check
      _
    $region27: #{gnn_forward.1} parent=1 // pred_check_branch
      %627 = sbr.rel (0) target = $region29
    $region28: #{gnn_forward.1} parent=1 // pred_region
      %628 = dma.done [#allocation3], 256
    $region29: #{gnn_forward.1} parent=1 // pred_fallthru
      _
    %629 = vsyncpa [#allocation3], 1

</llo_original>
